<compile_context>
chip_gen: v5e
topology: v5e:2x2
jax: 0.10.0
libtpu: 0.0.40
codegen_flags: <defaults>
</compile_context>

<pallas_src>
import numpy as np
import jax
import jax.numpy as jnp
from jax import lax
from jax.experimental import pallas as pl
from jax.experimental.pallas import tpu as pltpu

# problem sizes (small, consistent with ResBlock's shape constraints)
N = 2              # batch
CHAN = 8           # channels ("chan" of ResBlock)
T = 8              # temporal length
H = W = 4          # spatial size (must be 4 so that net(x) + x is well-defined)
S = H * W * CHAN   # flattened per-frame state = 128 (lane aligned)
NT = N * T         # batch folded into matmul M dimension = 16

KS, STRIDE, PAD = 4, 2, 3   # spatial conv params of BasicR2Plus1D
KT, PAD_T = 3, 1            # temporal conv params


# ---------------------------------------------------------------------------
# Parameter setup (plain numpy glue): fold the convs into matrices.
# ---------------------------------------------------------------------------
def _spatial_matrix(w1):
    """Dense (H*W*Cin, OH*OW*Cout) matrix of the per-frame (1,k,k) conv."""
    Cout, Cin, KH, KW = w1.shape
    OH = (H + 2 * PAD - KH) // STRIDE + 1
    OW = (W + 2 * PAD - KW) // STRIDE + 1
    assert OH == H and OW == W
    M = np.zeros((H * W * Cin, OH * OW * Cout), dtype=np.float32)
    for oh in range(OH):
        for ow in range(OW):
            for kh in range(KH):
                ih = oh * STRIDE + kh - PAD
                if ih < 0 or ih >= H:
                    continue
                for kw in range(KW):
                    iw = ow * STRIDE + kw - PAD
                    if iw < 0 or iw >= W:
                        continue
                    r0 = (ih * W + iw) * Cin
                    c0 = (oh * OW + ow) * Cout
                    # M[r0+ci, c0+co] = w1[co, ci, kh, kw]
                    M[r0:r0 + Cin, c0:c0 + Cout] += w1[:, :, kh, kw].T
    return M


def _temporal_matrices(w2):
    """Three block-diagonal (S, S) matrices, one per temporal tap (kt=0,1,2)."""
    Cout, Cin, Kt = w2.shape
    mats = []
    for kt in range(Kt):
        # out[(hw)*C+co] += in[(hw)*C+ci] * w2[co, ci, kt]
        mats.append(np.kron(np.eye(H * W, dtype=np.float32), w2[:, :, kt].T))
    return mats


# ---------------------------------------------------------------------------
# Pallas kernel: full ResBlock forward, batch folded into rows.
# ---------------------------------------------------------------------------
def resblock_kernel(x_ref, wsp_ref, wt_ref, o_ref):
    # x_ref  : (NT, S)        f32  activations, row = b*T + t
    # wsp_ref: (3, S, S)      bf16 spatial-conv matrices, one per BasicR2Plus1D
    # wt_ref : (3, 3, S, S)   bf16 temporal-tap matrices [blk, tap, S, S]
    # o_ref  : (NT, S)        f32  output (aliased with x in HBM)
    x = x_ref[...]                                    # (NT, S) f32

    # Batch-boundary row masks for the temporal conv's zero padding:
    # row r = b*T + t has a valid t-1 frame iff r % T != 0, and a valid t+1
    # frame iff r % T != T-1.  (pltpu.roll is circular, so wrapped rows must
    # be zeroed here.)
    row = lax.broadcasted_iota(jnp.int32, (NT, S), 0)
    keep_prev = (row % T) != 0
    keep_next = (row % T) != (T - 1)

    h = x.astype(jnp.bfloat16)
    b = None
    for blk in range(3):
        # conv1 (spatial, per-frame) + ReLU : one (NT,S)@(S,S) matmul
        a_f32 = jnp.maximum(
            jnp.dot(h, wsp_ref[blk], preferred_element_type=jnp.float32), 0.0)
        a = a_f32.astype(jnp.bfloat16)

        # conv2 (temporal k=3, pad=1): center tap can issue immediately; the
        # +-1 shifts go through the XLU (roll) + VPU (mask) in parallel.
        b = jnp.dot(a, wt_ref[blk, 1], preferred_element_type=jnp.float32)

        a_prev = jnp.where(keep_prev, pltpu.roll(a_f32, 1, 0),
                           0.0).astype(jnp.bfloat16)        # a[t-1], 0 at t=0
        a_next = jnp.where(keep_next, pltpu.roll(a_f32, NT - 1, 0),
                           0.0).astype(jnp.bfloat16)        # a[t+1], 0 at t=T-1

        b = b + jnp.dot(a_prev, wt_ref[blk, 0],
                        preferred_element_type=jnp.float32)
        b = b + jnp.dot(a_next, wt_ref[blk, 2],
                        preferred_element_type=jnp.float32)

        # ReLU between BasicR2Plus1D blocks, but not after the last one
        if blk < 2:
            h = jnp.maximum(b, 0.0).astype(jnp.bfloat16)

    o_ref[...] = b + x                                # residual add in f32


def resblock_pallas(x_flat, wsp, wt):
    # per block: 1 spatial + 3 temporal-tap matmuls, all (NT,S)@(S,S)
    flops = 3 * 4 * (2 * NT * S * S)
    bytes_accessed = (NT * S * 4 * 2                  # x in + out (f32)
                      + int(wsp.size) * 2 + int(wt.size) * 2)
    return pl.pallas_call(
        resblock_kernel,
        out_shape=jax.ShapeDtypeStruct((NT, S), jnp.float32),
        grid_spec=pltpu.PrefetchScalarGridSpec(
            num_scalar_prefetch=0,
            grid=(1,),
            in_specs=[
                pl.BlockSpec((NT, S), lambda i: (0, 0)),
                pl.BlockSpec((3, S, S), lambda i: (0, 0, 0)),
                pl.BlockSpec((3, 3, S, S), lambda i: (0, 0, 0, 0)),
            ],
            out_specs=pl.BlockSpec((NT, S), lambda i: (0, 0)),
        ),
        compiler_params=pltpu.CompilerParams(
            dimension_semantics=("arbitrary",)),
        input_output_aliases={0: 0},
        cost_estimate=pl.CostEstimate(
            flops=flops, transcendentals=0, bytes_accessed=bytes_accessed),
    )(x_flat, wsp, wt)


# ---------------------------------------------------------------------------
# Pure-JAX reference (mirrors the PyTorch module, NCTHW layout, f32 HIGHEST).
# ---------------------------------------------------------------------------
def _conv3d(x, w, strides, padding):
    return jax.lax.conv_general_dilated(
        x, w, window_strides=strides, padding=padding,
        dimension_numbers=("NCDHW", "OIDHW", "NCDHW"),
        precision=jax.lax.Precision.HIGHEST)


def resblock_ref(x, params):
    h = x
    for i, (w1, w2) in enumerate(params):
        h = jax.nn.relu(_conv3d(h, w1, (1, STRIDE, STRIDE),
                                [(0, 0), (PAD, PAD), (PAD, PAD)]))
        h = _conv3d(h, w2, (1, 1, 1), [(PAD_T, PAD_T), (0, 0), (0, 0)])
        if i < 2:
            h = jax.nn.relu(h)
    return h + x


if __name__ == "__main__":
    key = jax.random.PRNGKey(0)
    keys = jax.random.split(key, 7)

    # Deterministic synthetic weights (Conv3d, bias=False):
    #  conv1.weight: (C, C, 1, 4, 4), conv2.weight: (C, C, 3, 1, 1)
    params = []
    for i in range(3):
        w1 = 0.05 * jax.random.normal(keys[2 * i], (CHAN, CHAN, 1, KS, KS),
                                      dtype=jnp.float32)
        w2 = 0.05 * jax.random.normal(keys[2 * i + 1], (CHAN, CHAN, KT, 1, 1),
                                      dtype=jnp.float32)
        params.append((w1, w2))

    # Fold convs into matrices for the kernel (then cast to bf16 for the MXU).
    wsp_np = np.stack([_spatial_matrix(np.asarray(w1)[:, :, 0])
                       for (w1, _) in params])                        # (3,S,S)
    wt_np = np.stack([np.stack(_temporal_matrices(
        np.asarray(w2)[:, :, :, 0, 0])) for (_, w2) in params])       # (3,3,S,S)

    wsp = jnp.asarray(wsp_np, dtype=jnp.bfloat16)
    wt = jnp.asarray(wt_np, dtype=jnp.bfloat16)

    # Input in PyTorch NCTHW convention.
    x_ncthw = jax.random.normal(keys[6], (N, CHAN, T, H, W), dtype=jnp.float32)

    # Layout plumbing: NCTHW -> (N*T, S) with S = H*W*C, row = b*T + t.
    x_flat = jnp.transpose(x_ncthw, (0, 2, 3, 4, 1)).reshape(NT, S)

    out_flat = jax.block_until_ready(resblock_pallas(x_flat, wsp, wt))
    out_ncthw = jnp.transpose(out_flat.reshape(N, T, H, W, CHAN),
                              (0, 4, 1, 2, 3))

    ref = jax.block_until_ready(resblock_ref(x_ncthw, params))
    np.testing.assert_allclose(np.asarray(out_ncthw), np.asarray(ref),
                               rtol=5e-2, atol=5e-2)
    print("KERNEL_OK")
</pallas_src>

<mosaic_0001>
module attributes {stable_mosaic.version = 11 : i64} {
  func.func @resblock_kernel(%arg0: i32, %arg1: memref<16x128xf32, #tpu.memory_space<vmem>>, %arg2: memref<3x128x128xbf16, #tpu.memory_space<vmem>>, %arg3: memref<3x3x128x128xbf16, #tpu.memory_space<vmem>>, %arg4: memref<16x128xf32, #tpu.memory_space<vmem>>) attributes {dimension_semantics = [#tpu.dimension_semantics<arbitrary>], iteration_bounds = array<i64: 1>, scalar_prefetch = 0 : i64, scratch_operands = 0 : i64, tpu.core_type = #tpu.core_type<tc>, window_params = [{pipeline_mode = #tpu.pipeline_mode<synchronous>, transform_indices = @transform_0, window_bounds = array<i64: 16, 128>}, {pipeline_mode = #tpu.pipeline_mode<synchronous>, transform_indices = @transform_1, window_bounds = array<i64: 3, 128, 128>}, {pipeline_mode = #tpu.pipeline_mode<synchronous>, transform_indices = @transform_2, window_bounds = array<i64: 3, 3, 128, 128>}, {pipeline_mode = #tpu.pipeline_mode<synchronous>, transform_indices = @transform_3, window_bounds = array<i64: 16, 128>}]} {
    %c0 = arith.constant 0 : index
    %c0_0 = arith.constant 0 : index
    %0 = vector.load %arg1[%c0, %c0_0] : memref<16x128xf32, #tpu.memory_space<vmem>>, vector<16x128xf32>
    %1 = tpu.iota {dimensions = array<i32: 0>} : vector<16x128xi32>
    %c8_i32 = arith.constant 8 : i32
    %c0_i32 = arith.constant 0 : i32
    %2 = arith.cmpi eq, %c8_i32, %c0_i32 : i32
    %c1_i32 = arith.constant 1 : i32
    %3 = arith.select %2, %c1_i32, %c8_i32 : i32
    %4 = vector.broadcast %3 : i32 to vector<16x128xi32>
    %5 = arith.remsi %1, %4 : vector<16x128xi32>
    %c0_i32_1 = arith.constant 0 : i32
    %6 = vector.broadcast %c0_i32_1 : i32 to vector<16x128xi32>
    %7 = arith.cmpi ne, %5, %6 : vector<16x128xi32>
    %c0_i32_2 = arith.constant 0 : i32
    %8 = vector.broadcast %c0_i32_2 : i32 to vector<16x128xi32>
    %9 = arith.cmpi slt, %5, %8 : vector<16x128xi32>
    %c0_i32_3 = arith.constant 0 : i32
    %10 = arith.cmpi slt, %3, %c0_i32_3 : i32
    %11 = vector.broadcast %10 : i1 to vector<16x128xi1>
    %12 = vector.broadcast %11 : vector<16x128xi1> to vector<16x128xi1>
    %13 = arith.xori %9, %12 : vector<16x128xi1>
    %14 = arith.andi %13, %7 : vector<16x128xi1>
    %15 = vector.broadcast %3 : i32 to vector<16x128xi32>
    %16 = arith.addi %5, %15 : vector<16x128xi32>
    %17 = arith.select %14, %16, %5 : vector<16x128xi1>, vector<16x128xi32>
    %c0_i32_4 = arith.constant 0 : i32
    %18 = vector.broadcast %c0_i32_4 : i32 to vector<16x128xi32>
    %19 = arith.cmpi ne, %17, %18 : vector<16x128xi32>
    %c8_i32_5 = arith.constant 8 : i32
    %c0_i32_6 = arith.constant 0 : i32
    %20 = arith.cmpi eq, %c8_i32_5, %c0_i32_6 : i32
    %c1_i32_7 = arith.constant 1 : i32
    %21 = arith.select %20, %c1_i32_7, %c8_i32_5 : i32
    %22 = vector.broadcast %21 : i32 to vector<16x128xi32>
    %23 = arith.remsi %1, %22 : vector<16x128xi32>
    %c0_i32_8 = arith.constant 0 : i32
    %24 = vector.broadcast %c0_i32_8 : i32 to vector<16x128xi32>
    %25 = arith.cmpi ne, %23, %24 : vector<16x128xi32>
    %c0_i32_9 = arith.constant 0 : i32
    %26 = vector.broadcast %c0_i32_9 : i32 to vector<16x128xi32>
    %27 = arith.cmpi slt, %23, %26 : vector<16x128xi32>
    %c0_i32_10 = arith.constant 0 : i32
    %28 = arith.cmpi slt, %21, %c0_i32_10 : i32
    %29 = vector.broadcast %28 : i1 to vector<16x128xi1>
    %30 = vector.broadcast %29 : vector<16x128xi1> to vector<16x128xi1>
    %31 = arith.xori %27, %30 : vector<16x128xi1>
    %32 = arith.andi %31, %25 : vector<16x128xi1>
    %33 = vector.broadcast %21 : i32 to vector<16x128xi32>
    %34 = arith.addi %23, %33 : vector<16x128xi32>
    %35 = arith.select %32, %34, %23 : vector<16x128xi1>, vector<16x128xi32>
    %c7_i32 = arith.constant 7 : i32
    %36 = vector.broadcast %c7_i32 : i32 to vector<16x128xi32>
    %37 = arith.cmpi ne, %35, %36 : vector<16x128xi32>
    %38 = arith.truncf %0 : vector<16x128xf32> to vector<16x128xbf16>
    %c0_11 = arith.constant 0 : index
    %c0_12 = arith.constant 0 : index
    %c0_13 = arith.constant 0 : index
    %39 = vector.load %arg2[%c0_11, %c0_12, %c0_13] : memref<3x128x128xbf16, #tpu.memory_space<vmem>>, vector<1x128x128xbf16>
    %40 = vector.shape_cast %39 : vector<1x128x128xbf16> to vector<128x128xbf16>
    %cst = arith.constant dense<0.000000e+00> : vector<16x128xf32>
    %41 = tpu.matmul %38, %40, %cst {dimension_numbers = #tpu.dot_dimension_numbers<[1], [0], [0], [1], [0, 0, 1, 1], [], []>} : vector<16x128xbf16>, vector<128x128xbf16>, vector<16x128xf32> -> vector<16x128xf32>
    %cst_14 = arith.constant 0.000000e+00 : f32
    %42 = vector.broadcast %cst_14 : f32 to vector<16x128xf32>
    %43 = arith.maximumf %41, %42 : vector<16x128xf32>
    %44 = arith.truncf %43 : vector<16x128xf32> to vector<16x128xbf16>
    %c0_15 = arith.constant 0 : index
    %c1 = arith.constant 1 : index
    %c0_16 = arith.constant 0 : index
    %c0_17 = arith.constant 0 : index
    %45 = vector.load %arg3[%c0_15, %c1, %c0_16, %c0_17] : memref<3x3x128x128xbf16, #tpu.memory_space<vmem>>, vector<1x1x128x128xbf16>
    %46 = vector.shape_cast %45 : vector<1x1x128x128xbf16> to vector<128x128xbf16>
    %cst_18 = arith.constant dense<0.000000e+00> : vector<16x128xf32>
    %47 = tpu.matmul %44, %46, %cst_18 {dimension_numbers = #tpu.dot_dimension_numbers<[1], [0], [0], [1], [0, 0, 1, 1], [], []>} : vector<16x128xbf16>, vector<128x128xbf16>, vector<16x128xf32> -> vector<16x128xf32>
    %c1_i32_19 = arith.constant 1 : i32
    %48 = tpu.dynamic_rotate %43 by %c1_i32_19 dim 0 : vector<16x128xf32>, i32 -> vector<16x128xf32>
    %cst_20 = arith.constant 0.000000e+00 : f32
    %49 = vector.broadcast %cst_20 : f32 to vector<16x128xf32>
    %50 = arith.select %19, %48, %49 : vector<16x128xi1>, vector<16x128xf32>
    %51 = arith.truncf %50 : vector<16x128xf32> to vector<16x128xbf16>
    %c15_i32 = arith.constant 15 : i32
    %52 = tpu.dynamic_rotate %43 by %c15_i32 dim 0 : vector<16x128xf32>, i32 -> vector<16x128xf32>
    %cst_21 = arith.constant 0.000000e+00 : f32
    %53 = vector.broadcast %cst_21 : f32 to vector<16x128xf32>
    %54 = arith.select %37, %52, %53 : vector<16x128xi1>, vector<16x128xf32>
    %55 = arith.truncf %54 : vector<16x128xf32> to vector<16x128xbf16>
    %c0_22 = arith.constant 0 : index
    %c0_23 = arith.constant 0 : index
    %c0_24 = arith.constant 0 : index
    %c0_25 = arith.constant 0 : index
    %56 = vector.load %arg3[%c0_22, %c0_23, %c0_24, %c0_25] : memref<3x3x128x128xbf16, #tpu.memory_space<vmem>>, vector<1x1x128x128xbf16>
    %57 = vector.shape_cast %56 : vector<1x1x128x128xbf16> to vector<128x128xbf16>
    %cst_26 = arith.constant dense<0.000000e+00> : vector<16x128xf32>
    %58 = tpu.matmul %51, %57, %cst_26 {dimension_numbers = #tpu.dot_dimension_numbers<[1], [0], [0], [1], [0, 0, 1, 1], [], []>} : vector<16x128xbf16>, vector<128x128xbf16>, vector<16x128xf32> -> vector<16x128xf32>
    %59 = arith.addf %47, %58 : vector<16x128xf32>
    %c0_27 = arith.constant 0 : index
    %c2 = arith.constant 2 : index
    %c0_28 = arith.constant 0 : index
    %c0_29 = arith.constant 0 : index
    %60 = vector.load %arg3[%c0_27, %c2, %c0_28, %c0_29] : memref<3x3x128x128xbf16, #tpu.memory_space<vmem>>, vector<1x1x128x128xbf16>
    %61 = vector.shape_cast %60 : vector<1x1x128x128xbf16> to vector<128x128xbf16>
    %cst_30 = arith.constant dense<0.000000e+00> : vector<16x128xf32>
    %62 = tpu.matmul %55, %61, %cst_30 {dimension_numbers = #tpu.dot_dimension_numbers<[1], [0], [0], [1], [0, 0, 1, 1], [], []>} : vector<16x128xbf16>, vector<128x128xbf16>, vector<16x128xf32> -> vector<16x128xf32>
    %63 = arith.addf %59, %62 : vector<16x128xf32>
    %cst_31 = arith.constant 0.000000e+00 : f32
    %64 = vector.broadcast %cst_31 : f32 to vector<16x128xf32>
    %65 = arith.maximumf %63, %64 : vector<16x128xf32>
    %66 = arith.truncf %65 : vector<16x128xf32> to vector<16x128xbf16>
    %c1_32 = arith.constant 1 : index
    %c0_33 = arith.constant 0 : index
    %c0_34 = arith.constant 0 : index
    %67 = vector.load %arg2[%c1_32, %c0_33, %c0_34] : memref<3x128x128xbf16, #tpu.memory_space<vmem>>, vector<1x128x128xbf16>
    %68 = vector.shape_cast %67 : vector<1x128x128xbf16> to vector<128x128xbf16>
    %cst_35 = arith.constant dense<0.000000e+00> : vector<16x128xf32>
    %69 = tpu.matmul %66, %68, %cst_35 {dimension_numbers = #tpu.dot_dimension_numbers<[1], [0], [0], [1], [0, 0, 1, 1], [], []>} : vector<16x128xbf16>, vector<128x128xbf16>, vector<16x128xf32> -> vector<16x128xf32>
    %cst_36 = arith.constant 0.000000e+00 : f32
    %70 = vector.broadcast %cst_36 : f32 to vector<16x128xf32>
    %71 = arith.maximumf %69, %70 : vector<16x128xf32>
    %72 = arith.truncf %71 : vector<16x128xf32> to vector<16x128xbf16>
    %c1_37 = arith.constant 1 : index
    %c1_38 = arith.constant 1 : index
    %c0_39 = arith.constant 0 : index
    %c0_40 = arith.constant 0 : index
    %73 = vector.load %arg3[%c1_37, %c1_38, %c0_39, %c0_40] : memref<3x3x128x128xbf16, #tpu.memory_space<vmem>>, vector<1x1x128x128xbf16>
    %74 = vector.shape_cast %73 : vector<1x1x128x128xbf16> to vector<128x128xbf16>
    %cst_41 = arith.constant dense<0.000000e+00> : vector<16x128xf32>
    %75 = tpu.matmul %72, %74, %cst_41 {dimension_numbers = #tpu.dot_dimension_numbers<[1], [0], [0], [1], [0, 0, 1, 1], [], []>} : vector<16x128xbf16>, vector<128x128xbf16>, vector<16x128xf32> -> vector<16x128xf32>
    %c1_i32_42 = arith.constant 1 : i32
    %76 = tpu.dynamic_rotate %71 by %c1_i32_42 dim 0 : vector<16x128xf32>, i32 -> vector<16x128xf32>
    %cst_43 = arith.constant 0.000000e+00 : f32
    %77 = vector.broadcast %cst_43 : f32 to vector<16x128xf32>
    %78 = arith.select %19, %76, %77 : vector<16x128xi1>, vector<16x128xf32>
    %79 = arith.truncf %78 : vector<16x128xf32> to vector<16x128xbf16>
    %c15_i32_44 = arith.constant 15 : i32
    %80 = tpu.dynamic_rotate %71 by %c15_i32_44 dim 0 : vector<16x128xf32>, i32 -> vector<16x128xf32>
    %cst_45 = arith.constant 0.000000e+00 : f32
    %81 = vector.broadcast %cst_45 : f32 to vector<16x128xf32>
    %82 = arith.select %37, %80, %81 : vector<16x128xi1>, vector<16x128xf32>
    %83 = arith.truncf %82 : vector<16x128xf32> to vector<16x128xbf16>
    %c1_46 = arith.constant 1 : index
    %c0_47 = arith.constant 0 : index
    %c0_48 = arith.constant 0 : index
    %c0_49 = arith.constant 0 : index
    %84 = vector.load %arg3[%c1_46, %c0_47, %c0_48, %c0_49] : memref<3x3x128x128xbf16, #tpu.memory_space<vmem>>, vector<1x1x128x128xbf16>
    %85 = vector.shape_cast %84 : vector<1x1x128x128xbf16> to vector<128x128xbf16>
    %cst_50 = arith.constant dense<0.000000e+00> : vector<16x128xf32>
    %86 = tpu.matmul %79, %85, %cst_50 {dimension_numbers = #tpu.dot_dimension_numbers<[1], [0], [0], [1], [0, 0, 1, 1], [], []>} : vector<16x128xbf16>, vector<128x128xbf16>, vector<16x128xf32> -> vector<16x128xf32>
    %87 = arith.addf %75, %86 : vector<16x128xf32>
    %c1_51 = arith.constant 1 : index
    %c2_52 = arith.constant 2 : index
    %c0_53 = arith.constant 0 : index
    %c0_54 = arith.constant 0 : index
    %88 = vector.load %arg3[%c1_51, %c2_52, %c0_53, %c0_54] : memref<3x3x128x128xbf16, #tpu.memory_space<vmem>>, vector<1x1x128x128xbf16>
    %89 = vector.shape_cast %88 : vector<1x1x128x128xbf16> to vector<128x128xbf16>
    %cst_55 = arith.constant dense<0.000000e+00> : vector<16x128xf32>
    %90 = tpu.matmul %83, %89, %cst_55 {dimension_numbers = #tpu.dot_dimension_numbers<[1], [0], [0], [1], [0, 0, 1, 1], [], []>} : vector<16x128xbf16>, vector<128x128xbf16>, vector<16x128xf32> -> vector<16x128xf32>
    %91 = arith.addf %87, %90 : vector<16x128xf32>
    %cst_56 = arith.constant 0.000000e+00 : f32
    %92 = vector.broadcast %cst_56 : f32 to vector<16x128xf32>
    %93 = arith.maximumf %91, %92 : vector<16x128xf32>
    %94 = arith.truncf %93 : vector<16x128xf32> to vector<16x128xbf16>
    %c2_57 = arith.constant 2 : index
    %c0_58 = arith.constant 0 : index
    %c0_59 = arith.constant 0 : index
    %95 = vector.load %arg2[%c2_57, %c0_58, %c0_59] : memref<3x128x128xbf16, #tpu.memory_space<vmem>>, vector<1x128x128xbf16>
    %96 = vector.shape_cast %95 : vector<1x128x128xbf16> to vector<128x128xbf16>
    %cst_60 = arith.constant dense<0.000000e+00> : vector<16x128xf32>
    %97 = tpu.matmul %94, %96, %cst_60 {dimension_numbers = #tpu.dot_dimension_numbers<[1], [0], [0], [1], [0, 0, 1, 1], [], []>} : vector<16x128xbf16>, vector<128x128xbf16>, vector<16x128xf32> -> vector<16x128xf32>
    %cst_61 = arith.constant 0.000000e+00 : f32
    %98 = vector.broadcast %cst_61 : f32 to vector<16x128xf32>
    %99 = arith.maximumf %97, %98 : vector<16x128xf32>
    %100 = arith.truncf %99 : vector<16x128xf32> to vector<16x128xbf16>
    %c2_62 = arith.constant 2 : index
    %c1_63 = arith.constant 1 : index
    %c0_64 = arith.constant 0 : index
    %c0_65 = arith.constant 0 : index
    %101 = vector.load %arg3[%c2_62, %c1_63, %c0_64, %c0_65] : memref<3x3x128x128xbf16, #tpu.memory_space<vmem>>, vector<1x1x128x128xbf16>
    %102 = vector.shape_cast %101 : vector<1x1x128x128xbf16> to vector<128x128xbf16>
    %cst_66 = arith.constant dense<0.000000e+00> : vector<16x128xf32>
    %103 = tpu.matmul %100, %102, %cst_66 {dimension_numbers = #tpu.dot_dimension_numbers<[1], [0], [0], [1], [0, 0, 1, 1], [], []>} : vector<16x128xbf16>, vector<128x128xbf16>, vector<16x128xf32> -> vector<16x128xf32>
    %c1_i32_67 = arith.constant 1 : i32
    %104 = tpu.dynamic_rotate %99 by %c1_i32_67 dim 0 : vector<16x128xf32>, i32 -> vector<16x128xf32>
    %cst_68 = arith.constant 0.000000e+00 : f32
    %105 = vector.broadcast %cst_68 : f32 to vector<16x128xf32>
    %106 = arith.select %19, %104, %105 : vector<16x128xi1>, vector<16x128xf32>
    %107 = arith.truncf %106 : vector<16x128xf32> to vector<16x128xbf16>
    %c15_i32_69 = arith.constant 15 : i32
    %108 = tpu.dynamic_rotate %99 by %c15_i32_69 dim 0 : vector<16x128xf32>, i32 -> vector<16x128xf32>
    %cst_70 = arith.constant 0.000000e+00 : f32
    %109 = vector.broadcast %cst_70 : f32 to vector<16x128xf32>
    %110 = arith.select %37, %108, %109 : vector<16x128xi1>, vector<16x128xf32>
    %111 = arith.truncf %110 : vector<16x128xf32> to vector<16x128xbf16>
    %c2_71 = arith.constant 2 : index
    %c0_72 = arith.constant 0 : index
    %c0_73 = arith.constant 0 : index
    %c0_74 = arith.constant 0 : index
    %112 = vector.load %arg3[%c2_71, %c0_72, %c0_73, %c0_74] : memref<3x3x128x128xbf16, #tpu.memory_space<vmem>>, vector<1x1x128x128xbf16>
    %113 = vector.shape_cast %112 : vector<1x1x128x128xbf16> to vector<128x128xbf16>
    %cst_75 = arith.constant dense<0.000000e+00> : vector<16x128xf32>
    %114 = tpu.matmul %107, %113, %cst_75 {dimension_numbers = #tpu.dot_dimension_numbers<[1], [0], [0], [1], [0, 0, 1, 1], [], []>} : vector<16x128xbf16>, vector<128x128xbf16>, vector<16x128xf32> -> vector<16x128xf32>
    %115 = arith.addf %103, %114 : vector<16x128xf32>
    %c2_76 = arith.constant 2 : index
    %c2_77 = arith.constant 2 : index
    %c0_78 = arith.constant 0 : index
    %c0_79 = arith.constant 0 : index
    %116 = vector.load %arg3[%c2_76, %c2_77, %c0_78, %c0_79] : memref<3x3x128x128xbf16, #tpu.memory_space<vmem>>, vector<1x1x128x128xbf16>
    %117 = vector.shape_cast %116 : vector<1x1x128x128xbf16> to vector<128x128xbf16>
    %cst_80 = arith.constant dense<0.000000e+00> : vector<16x128xf32>
    %118 = tpu.matmul %111, %117, %cst_80 {dimension_numbers = #tpu.dot_dimension_numbers<[1], [0], [0], [1], [0, 0, 1, 1], [], []>} : vector<16x128xbf16>, vector<128x128xbf16>, vector<16x128xf32> -> vector<16x128xf32>
    %119 = arith.addf %115, %118 : vector<16x128xf32>
    %120 = arith.addf %119, %0 : vector<16x128xf32>
    %c0_81 = arith.constant 0 : index
    %c0_82 = arith.constant 0 : index
    %121 = vector.load %arg4[%c0_81, %c0_82] : memref<16x128xf32, #tpu.memory_space<vmem>>, vector<16x128xf32>
    tpu.vector_store %arg4[%c0_81, %c0_82], %120 {strides = array<i32>} : memref<16x128xf32, #tpu.memory_space<vmem>>, vector<16x128xf32>,
    return
  }
  func.func @transform_0(%arg0: i32) -> (i32, i32) {
    %c0_i32 = arith.constant 0 : i32
    %c0_i32_0 = arith.constant 0 : i32
    %c0_i32_1 = arith.constant 0 : i32
    return %c0_i32, %c0_i32_0 : i32, i32
  }
  func.func @transform_1(%arg0: i32) -> (i32, i32, i32) {
    %c0_i32 = arith.constant 0 : i32
    %c0_i32_0 = arith.constant 0 : i32
    %c0_i32_1 = arith.constant 0 : i32
    %c0_i32_2 = arith.constant 0 : i32
    return %c0_i32, %c0_i32_0, %c0_i32_1 : i32, i32, i32
  }
  func.func @transform_2(%arg0: i32) -> (i32, i32, i32, i32) {
    %c0_i32 = arith.constant 0 : i32
    %c0_i32_0 = arith.constant 0 : i32
    %c0_i32_1 = arith.constant 0 : i32
    %c0_i32_2 = arith.constant 0 : i32
    %c0_i32_3 = arith.constant 0 : i32
    return %c0_i32, %c0_i32_0, %c0_i32_1, %c0_i32_2 : i32, i32, i32, i32
  }
  func.func @transform_3(%arg0: i32) -> (i32, i32) {
    %c0_i32 = arith.constant 0 : i32
    %c0_i32_0 = arith.constant 0 : i32
    %c0_i32_1 = arith.constant 0 : i32
    return %c0_i32, %c0_i32_0 : i32, i32
  }
}

</mosaic_0001>

<llo_original>
// kernel: tpu_custom_call.1
$region0: #{tpu_custom_call.1}
  #allocation0 [shape = 'u32[]', space=smem, size = 0x4, offset = 0x4, fixed_abs, tag = 'smem constant byte address 0x4 - core index']
  #allocation1 [shape = 'u32[72,128]{1,0:T(1,128)}', space=vmem, size = 0x9000, scoped, tag = 'internal scratch']
  %s0 = inlined_call_operand.hbm [shape: f32[16,128], index: 0, kind: input, shape index: {}, may-alias: {0,3}]
  %s1 = inlined_call_operand.hbm [shape: bf16[3,128,128], index: 1, kind: input, shape index: {}]
  %s2 = inlined_call_operand.hbm [shape: bf16[3,3,128,128], index: 2, kind: input, shape index: {}]
  %s3 = inlined_call_operand.hbm [shape: f32[16,128], index: 3, kind: output, shape index: {}, may-alias: {0,3}]
  %s4 = sld [smem:[#allocation0]]
  $region34: #{tpu_custom_call.1} parent=0
    _
  %s6 = ssub.s32 1, %s4
  %s7 = scalar_select 0, %s6, %s4
  $region1: #{tpu_custom_call.1} parent=0
    #allocation2 [shape = 'u8[8192]{0}', space=vmem, size = 0x2000, scoped, tag = 'input window, operand 0, single buffered']
    #allocation3 [shape = 's32[1]{0}', space=sflag, size = 0x4, scoped, tag = 'scoped memory for tpu_custom_call.1']
    #allocation4 [shape = 's32[1]{0}', space=sflag, size = 0x4, scoped, tag = 'scoped memory for tpu_custom_call.1']
    #allocation5 [shape = 'u8[98304]{0}', space=vmem, size = 0x18000, scoped, tag = 'input window, operand 1, single buffered']
    #allocation6 [shape = 's32[1]{0}', space=sflag, size = 0x4, scoped, tag = 'scoped memory for tpu_custom_call.1']
    #allocation7 [shape = 'u8[294912]{0}', space=vmem, size = 0x48000, scoped, tag = 'input window, operand 2, single buffered']
    #allocation8 [shape = 'u8[8192]{0}', space=vmem, size = 0x2000, scoped, tag = 'output window, operand 0, single buffered']
    %8 = vsyncpa [#allocation3], 0
    %9 = vsyncpa [#allocation6], 0
    %10 = vsyncpa [#allocation4], 0
    // Predicated region
    $region2: #{tpu_custom_call.1} parent=1 // pred_check
      _
    $region3: #{tpu_custom_call.1} parent=1 // pred_check_branch
      %12 = sbr.rel (0) target = $region5
    $region4: #{tpu_custom_call.1} parent=1 // pred_region
      %14 = vsyncadd [#allocation3], 0
      %s15 = sshll.u32 %s0, 4
      %s16 = int_to_ptr.hbm [resolvable:$true] %s15
      %s17 = sshll.u32 [#allocation2], 4
      %s18 = int_to_ptr.vmem [resolvable:$true] %s17
      %23 = dma.hbm_to_vmem [thread:$0]  %s16, 256, %s18, [#allocation3], 128, 128, 8
    $region5: #{tpu_custom_call.1} parent=1 // pred_fallthru
      _
    // Predicated region
    $region6: #{tpu_custom_call.1} parent=1 // pred_check
      _
    $region7: #{tpu_custom_call.1} parent=1 // pred_check_branch
      %25 = sbr.rel (0) target = $region9
    $region8: #{tpu_custom_call.1} parent=1 // pred_region
      %27 = vsyncadd [#allocation6], 0
      %s28 = sshll.u32 %s1, 4
      %s29 = int_to_ptr.hbm [resolvable:$true] %s28
      %s30 = sshll.u32 [#allocation5], 4
      %s31 = int_to_ptr.vmem [resolvable:$true] %s30
      %36 = dma.hbm_to_vmem [thread:$0]  %s29, 3072, %s31, [#allocation6], 64, 64, 4
    $region9: #{tpu_custom_call.1} parent=1 // pred_fallthru
      _
    // Predicated region
    $region10: #{tpu_custom_call.1} parent=1 // pred_check
      _
    $region11: #{tpu_custom_call.1} parent=1 // pred_check_branch
      %38 = sbr.rel (0) target = $region13
    $region12: #{tpu_custom_call.1} parent=1 // pred_region
      %40 = vsyncadd [#allocation6], 0
      %s41 = sshll.u32 %s2, 4
      %s42 = int_to_ptr.hbm [resolvable:$true] %s41
      %s43 = sshll.u32 [#allocation7], 4
      %s44 = int_to_ptr.vmem [resolvable:$true] %s43
      %49 = dma.hbm_to_vmem [thread:$0]  %s42, 9216, %s44, [#allocation6], 64, 64, 4
    $region13: #{tpu_custom_call.1} parent=1 // pred_fallthru
      _
    // Predicated region
    $region14: #{tpu_custom_call.1} parent=1 // pred_check
      _
    $region15: #{tpu_custom_call.1} parent=1 // pred_check_branch
      %51 = sbr.rel (0) target = $region17
    $region16: #{tpu_custom_call.1} parent=1 // pred_region
      %53 = dma.done [#allocation3], 256
    $region17: #{tpu_custom_call.1} parent=1 // pred_fallthru
      _
    // Predicated region
    $region18: #{tpu_custom_call.1} parent=1 // pred_check
      _
    $region19: #{tpu_custom_call.1} parent=1 // pred_check_branch
      %55 = sbr.rel (0) target = $region21
    $region20: #{tpu_custom_call.1} parent=1 // pred_region
      %57 = dma.done [#allocation6], 3072
    $region21: #{tpu_custom_call.1} parent=1 // pred_fallthru
      _
    // Predicated region
    $region22: #{tpu_custom_call.1} parent=1 // pred_check
      _
    $region23: #{tpu_custom_call.1} parent=1 // pred_check_branch
      %59 = sbr.rel (0) target = $region25
    $region24: #{tpu_custom_call.1} parent=1 // pred_region
      %61 = dma.done [#allocation6], 9216
    $region25: #{tpu_custom_call.1} parent=1 // pred_fallthru
      _
    %v62 = vld [vmem:[#allocation2] sm:$0xff]
    %v63 = vld [vmem:[#allocation2 + $0x8] sm:$0xff]
    %v64 = vlaneseq
    %v65 = vshrl.u32 %v64, 7
    %v66 = vadd.s32 %v65, 8
    %vm67 = vcmp.lt.s32.totalorder %v65, 0
    %v68 = vsub.s32 0, %v65
    %v69 = vsel %vm67, %v68, %v65
    %v70 = vshrl.u32 %v69, 3
    %v71 = vand.u32 %v69, 7
    %v72 = vsub.s32 0, %v71
    %v73 = vsel %vm67, %v72, %v71
    %vm74 = vcmp.lt.s32.totalorder %v66, 0
    %v75 = vsub.s32 0, %v66
    %v76 = vsel %vm74, %v75, %v66
    %v77 = vshrl.u32 %v76, 3
    %v78 = vand.u32 %v76, 7
    %v79 = vsub.s32 0, %v78
    %v80 = vsel %vm74, %v79, %v78
    %vm81 = vcmp.ne.s32.totalorder %v73, 0
    %vm82 = vcmp.ne.s32.totalorder %v80, 0
    %vm83 = vcmp.lt.s32.totalorder %v73, 0
    %vm84 = vcmp.lt.s32.totalorder %v80, 0
    %vm85 = vmand %vm83, %vm81
    %vm86 = vmand %vm84, %vm82
    %v87 = vadd.s32 %v73, 8
    %v88 = vadd.s32 %v80, 8
    %v89 = vsel %vm85, %v87, %v73
    %v90 = vsel %vm86, %v88, %v80
    %vm91 = vcmp.ne.s32.totalorder %v89, 0
    %vm92 = vcmp.ne.s32.totalorder %v90, 0
    %vm93 = vcmp.ne.s32.totalorder %v89, 7
    %vm94 = vcmp.ne.s32.totalorder %v90, 7
    %v95 = vpack.c.bf16 %v63, %v62
    %v96 = vld [vmem:[#allocation5] sm:$0xf]
    %v97 = vld [vmem:[#allocation5 + $0x4] sm:$0xf]
    %v98 = vld [vmem:[#allocation5 + $0x8] sm:$0xf]
    %v99 = vld [vmem:[#allocation5 + $0xc] sm:$0xf]
    %v100 = vld [vmem:[#allocation5 + $0x10] sm:$0xf]
    %v101 = vld [vmem:[#allocation5 + $0x14] sm:$0xf]
    %v102 = vld [vmem:[#allocation5 + $0x18] sm:$0xf]
    %v103 = vld [vmem:[#allocation5 + $0x1c] sm:$0xf]
    %v104 = vld [vmem:[#allocation5 + $0x20] sm:$0xf]
    %v105 = vld [vmem:[#allocation5 + $0x24] sm:$0xf]
    %v106 = vld [vmem:[#allocation5 + $0x28] sm:$0xf]
    %v107 = vld [vmem:[#allocation5 + $0x2c] sm:$0xf]
    %v108 = vld [vmem:[#allocation5 + $0x30] sm:$0xf]
    %v109 = vld [vmem:[#allocation5 + $0x34] sm:$0xf]
    %v110 = vld [vmem:[#allocation5 + $0x38] sm:$0xf]
    %v111 = vld [vmem:[#allocation5 + $0x3c] sm:$0xf]
    %v128 = vunpack.c.l.b16 %v96
    %v129 = vunpack.c.l.b16 %v97
    %v130 = vunpack.c.l.b16 %v98
    %v131 = vunpack.c.l.b16 %v99
    %v132 = vunpack.c.l.b16 %v100
    %v133 = vunpack.c.l.b16 %v101
    %v134 = vunpack.c.l.b16 %v102
    %v135 = vunpack.c.l.b16 %v103
    %v136 = vunpack.c.l.b16 %v104
    %v137 = vunpack.c.l.b16 %v105
    %v138 = vunpack.c.l.b16 %v106
    %v139 = vunpack.c.l.b16 %v107
    %v140 = vunpack.c.l.b16 %v108
    %v141 = vunpack.c.l.b16 %v109
    %v142 = vunpack.c.l.b16 %v110
    %v143 = vunpack.c.l.b16 %v111
    %v144 = vpack.c.b16 %v129, %v128
    %v145 = vpack.c.b16 %v131, %v130
    %v146 = vpack.c.b16 %v133, %v132
    %v147 = vpack.c.b16 %v135, %v134
    %v148 = vpack.c.b16 %v137, %v136
    %v149 = vpack.c.b16 %v139, %v138
    %v150 = vpack.c.b16 %v141, %v140
    %v151 = vpack.c.b16 %v143, %v142
    %160 = vmatpush.bf16.msra.mxu0 %v151
    %161 = vmatpush.bf16.msra.mxu0 %v150
    %162 = vmatpush.bf16.msra.mxu0 %v149
    %163 = vmatpush.bf16.msra.mxu0 %v148
    %164 = vmatpush.bf16.msra.mxu0 %v147
    %165 = vmatpush.bf16.msra.mxu0 %v146
    %166 = vmatpush.bf16.msra.mxu0 %v145
    %167 = vmatpush.bf16.msra.mxu0 %v144
    %168 = vmatmul.bf16.gmra.mxu0 %v95
    %v169 = vpop.f32.mrf.mxu0
    %v170 = vadd.f32 0.0, %v169
    %v171 = vpop.f32.mrf.mxu0
    %v172 = vadd.f32 0.0, %v171
    %173 = vdwg.mxu0
    %v174 = vmax.f32 %v170, 0.0
    %v175 = vmax.f32 %v172, 0.0
    %v176 = vpack.c.bf16 %v175, %v174
    %s177 = scalar_lea.vmem [#allocation7], 64
    %v178 = vld [vmem:[%s177] sm:$0xf]
    %v179 = vld [vmem:[%s177 + $0x4] sm:$0xf]
    %v180 = vld [vmem:[%s177 + $0x8] sm:$0xf]
    %v181 = vld [vmem:[%s177 + $0xc] sm:$0xf]
    %v182 = vld [vmem:[%s177 + $0x10] sm:$0xf]
    %v183 = vld [vmem:[%s177 + $0x14] sm:$0xf]
    %v184 = vld [vmem:[%s177 + $0x18] sm:$0xf]
    %v185 = vld [vmem:[%s177 + $0x1c] sm:$0xf]
    %v186 = vld [vmem:[%s177 + $0x20] sm:$0xf]
    %v187 = vld [vmem:[%s177 + $0x24] sm:$0xf]
    %v188 = vld [vmem:[%s177 + $0x28] sm:$0xf]
    %v189 = vld [vmem:[%s177 + $0x2c] sm:$0xf]
    %v190 = vld [vmem:[%s177 + $0x30] sm:$0xf]
    %v191 = vld [vmem:[%s177 + $0x34] sm:$0xf]
    %v192 = vld [vmem:[%s177 + $0x38] sm:$0xf]
    %v193 = vld [vmem:[%s177 + $0x3c] sm:$0xf]
    %v194 = vrot.slane %v174, 7
    %v195 = vrot.slane %v175, 7
    %vm196 = vcmp.lt.s32.totalorder %v65, 1
    %v197 = vsel %vm196, %v194, %v195
    %v198 = vsel %vm196, %v195, %v194
    %v199 = vsel %vm91, %v198, 0.0
    %v200 = vsel %vm92, %v197, 0.0
    %v201 = vpack.c.bf16 %v200, %v199
    %v202 = vrot.slane %v174, 1
    %v203 = vrot.slane %v175, 1
    %vm204 = vcmp.lt.s32.totalorder %v65, 7
    %v205 = vsel %vm204, %v202, %v203
    %v206 = vsel %vm204, %v203, %v202
    %v207 = vsel %vm93, %v205, 0.0
    %v208 = vsel %vm94, %v206, 0.0
    %v209 = vpack.c.bf16 %v208, %v207
    %v210 = vld [vmem:[#allocation7] sm:$0xf]
    %v211 = vld [vmem:[#allocation7 + $0x4] sm:$0xf]
    %v212 = vld [vmem:[#allocation7 + $0x8] sm:$0xf]
    %v213 = vld [vmem:[#allocation7 + $0xc] sm:$0xf]
    %v214 = vld [vmem:[#allocation7 + $0x10] sm:$0xf]
    %v215 = vld [vmem:[#allocation7 + $0x14] sm:$0xf]
    %v216 = vld [vmem:[#allocation7 + $0x18] sm:$0xf]
    %v217 = vld [vmem:[#allocation7 + $0x1c] sm:$0xf]
    %v218 = vld [vmem:[#allocation7 + $0x20] sm:$0xf]
    %v219 = vld [vmem:[#allocation7 + $0x24] sm:$0xf]
    %v220 = vld [vmem:[#allocation7 + $0x28] sm:$0xf]
    %v221 = vld [vmem:[#allocation7 + $0x2c] sm:$0xf]
    %v222 = vld [vmem:[#allocation7 + $0x30] sm:$0xf]
    %v223 = vld [vmem:[#allocation7 + $0x34] sm:$0xf]
    %v224 = vld [vmem:[#allocation7 + $0x38] sm:$0xf]
    %v225 = vld [vmem:[#allocation7 + $0x3c] sm:$0xf]
    %v242 = vunpack.c.l.b16 %v210
    %v243 = vunpack.c.l.b16 %v211
    %v244 = vunpack.c.l.b16 %v212
    %v245 = vunpack.c.l.b16 %v213
    %v246 = vunpack.c.l.b16 %v214
    %v247 = vunpack.c.l.b16 %v215
    %v248 = vunpack.c.l.b16 %v216
    %v249 = vunpack.c.l.b16 %v217
    %v250 = vunpack.c.l.b16 %v218
    %v251 = vunpack.c.l.b16 %v219
    %v252 = vunpack.c.l.b16 %v220
    %v253 = vunpack.c.l.b16 %v221
    %v254 = vunpack.c.l.b16 %v222
    %v255 = vunpack.c.l.b16 %v223
    %v256 = vunpack.c.l.b16 %v224
    %v257 = vunpack.c.l.b16 %v225
    %v258 = vpack.c.b16 %v243, %v242
    %v259 = vpack.c.b16 %v245, %v244
    %v260 = vpack.c.b16 %v247, %v246
    %v261 = vpack.c.b16 %v249, %v248
    %v262 = vpack.c.b16 %v251, %v250
    %v263 = vpack.c.b16 %v253, %v252
    %v264 = vpack.c.b16 %v255, %v254
    %v265 = vpack.c.b16 %v257, %v256
    %274 = vmatpush.bf16.msra.mxu0 %v265
    %275 = vmatpush.bf16.msra.mxu0 %v264
    %276 = vmatpush.bf16.msra.mxu0 %v263
    %277 = vmatpush.bf16.msra.mxu0 %v262
    %278 = vmatpush.bf16.msra.mxu0 %v261
    %279 = vmatpush.bf16.msra.mxu0 %v260
    %280 = vmatpush.bf16.msra.mxu0 %v259
    %281 = vmatpush.bf16.msra.mxu0 %v258
    %282 = vmatmul.bf16.gmra.mxu0 %v201
    %v283 = vpop.f32.mrf.mxu0
    %v284 = vadd.f32 0.0, %v283
    %v285 = vpop.f32.mrf.mxu0
    %v286 = vadd.f32 0.0, %v285
    %287 = vdwg.mxu0
    %v304 = vunpack.c.l.b16 %v178
    %v305 = vunpack.c.l.b16 %v179
    %v306 = vunpack.c.l.b16 %v180
    %v307 = vunpack.c.l.b16 %v181
    %v308 = vunpack.c.l.b16 %v182
    %v309 = vunpack.c.l.b16 %v183
    %v310 = vunpack.c.l.b16 %v184
    %v311 = vunpack.c.l.b16 %v185
    %v312 = vunpack.c.l.b16 %v186
    %v313 = vunpack.c.l.b16 %v187
    %v314 = vunpack.c.l.b16 %v188
    %v315 = vunpack.c.l.b16 %v189
    %v316 = vunpack.c.l.b16 %v190
    %v317 = vunpack.c.l.b16 %v191
    %v318 = vunpack.c.l.b16 %v192
    %v319 = vunpack.c.l.b16 %v193
    %v320 = vpack.c.b16 %v305, %v304
    %v321 = vpack.c.b16 %v307, %v306
    %v322 = vpack.c.b16 %v309, %v308
    %v323 = vpack.c.b16 %v311, %v310
    %v324 = vpack.c.b16 %v313, %v312
    %v325 = vpack.c.b16 %v315, %v314
    %v326 = vpack.c.b16 %v317, %v316
    %v327 = vpack.c.b16 %v319, %v318
    %336 = vmatpush.bf16.msra.mxu0 %v327
    %337 = vmatpush.bf16.msra.mxu0 %v326
    %338 = vmatpush.bf16.msra.mxu0 %v325
    %339 = vmatpush.bf16.msra.mxu0 %v324
    %340 = vmatpush.bf16.msra.mxu0 %v323
    %341 = vmatpush.bf16.msra.mxu0 %v322
    %342 = vmatpush.bf16.msra.mxu0 %v321
    %343 = vmatpush.bf16.msra.mxu0 %v320
    %344 = vmatmul.bf16.gmra.mxu0 %v176
    %v345 = vpop.f32.mrf.mxu0
    %v346 = vadd.f32 %v284, %v345
    %v347 = vpop.f32.mrf.mxu0
    %v348 = vadd.f32 %v286, %v347
    %349 = vdwg.mxu0
    %s350 = scalar_lea.vmem [#allocation7], 128
    %v351 = vld [vmem:[%s350] sm:$0xf]
    %v352 = vld [vmem:[%s350 + $0x4] sm:$0xf]
    %v353 = vld [vmem:[%s350 + $0x8] sm:$0xf]
    %v354 = vld [vmem:[%s350 + $0xc] sm:$0xf]
    %v355 = vld [vmem:[%s350 + $0x10] sm:$0xf]
    %v356 = vld [vmem:[%s350 + $0x14] sm:$0xf]
    %v357 = vld [vmem:[%s350 + $0x18] sm:$0xf]
    %v358 = vld [vmem:[%s350 + $0x1c] sm:$0xf]
    %v359 = vld [vmem:[%s350 + $0x20] sm:$0xf]
    %v360 = vld [vmem:[%s350 + $0x24] sm:$0xf]
    %v361 = vld [vmem:[%s350 + $0x28] sm:$0xf]
    %v362 = vld [vmem:[%s350 + $0x2c] sm:$0xf]
    %v363 = vld [vmem:[%s350 + $0x30] sm:$0xf]
    %v364 = vld [vmem:[%s350 + $0x34] sm:$0xf]
    %v365 = vld [vmem:[%s350 + $0x38] sm:$0xf]
    %v366 = vld [vmem:[%s350 + $0x3c] sm:$0xf]
    %v383 = vunpack.c.l.b16 %v351
    %v384 = vunpack.c.l.b16 %v352
    %v385 = vunpack.c.l.b16 %v353
    %v386 = vunpack.c.l.b16 %v354
    %v387 = vunpack.c.l.b16 %v355
    %v388 = vunpack.c.l.b16 %v356
    %v389 = vunpack.c.l.b16 %v357
    %v390 = vunpack.c.l.b16 %v358
    %v391 = vunpack.c.l.b16 %v359
    %v392 = vunpack.c.l.b16 %v360
    %v393 = vunpack.c.l.b16 %v361
    %v394 = vunpack.c.l.b16 %v362
    %v395 = vunpack.c.l.b16 %v363
    %v396 = vunpack.c.l.b16 %v364
    %v397 = vunpack.c.l.b16 %v365
    %v398 = vunpack.c.l.b16 %v366
    %v399 = vpack.c.b16 %v384, %v383
    %v400 = vpack.c.b16 %v386, %v385
    %v401 = vpack.c.b16 %v388, %v387
    %v402 = vpack.c.b16 %v390, %v389
    %v403 = vpack.c.b16 %v392, %v391
    %v404 = vpack.c.b16 %v394, %v393
    %v405 = vpack.c.b16 %v396, %v395
    %v406 = vpack.c.b16 %v398, %v397
    %415 = vmatpush.bf16.msra.mxu0 %v406
    %416 = vmatpush.bf16.msra.mxu0 %v405
    %417 = vmatpush.bf16.msra.mxu0 %v404
    %418 = vmatpush.bf16.msra.mxu0 %v403
    %419 = vmatpush.bf16.msra.mxu0 %v402
    %420 = vmatpush.bf16.msra.mxu0 %v401
    %421 = vmatpush.bf16.msra.mxu0 %v400
    %422 = vmatpush.bf16.msra.mxu0 %v399
    %423 = vmatmul.bf16.gmra.mxu0 %v209
    %v424 = vpop.f32.mrf.mxu0
    %v425 = vadd.f32 0.0, %v424
    %v426 = vpop.f32.mrf.mxu0
    %v427 = vadd.f32 0.0, %v426
    %428 = vdwg.mxu0
    %v429 = vadd.f32 %v346, %v425
    %v430 = vadd.f32 %v348, %v427
    %v431 = vmax.f32 %v429, 0.0
    %v432 = vmax.f32 %v430, 0.0
    %v433 = vpack.c.bf16 %v432, %v431
    %s434 = scalar_lea.vmem [#allocation5], 64
    %v435 = vld [vmem:[%s434] sm:$0xf]
    %v436 = vld [vmem:[%s434 + $0x4] sm:$0xf]
    %v437 = vld [vmem:[%s434 + $0x8] sm:$0xf]
    %v438 = vld [vmem:[%s434 + $0xc] sm:$0xf]
    %v439 = vld [vmem:[%s434 + $0x10] sm:$0xf]
    %v440 = vld [vmem:[%s434 + $0x14] sm:$0xf]
    %v441 = vld [vmem:[%s434 + $0x18] sm:$0xf]
    %v442 = vld [vmem:[%s434 + $0x1c] sm:$0xf]
    %v443 = vld [vmem:[%s434 + $0x20] sm:$0xf]
    %v444 = vld [vmem:[%s434 + $0x24] sm:$0xf]
    %v445 = vld [vmem:[%s434 + $0x28] sm:$0xf]
    %v446 = vld [vmem:[%s434 + $0x2c] sm:$0xf]
    %v447 = vld [vmem:[%s434 + $0x30] sm:$0xf]
    %v448 = vld [vmem:[%s434 + $0x34] sm:$0xf]
    %v449 = vld [vmem:[%s434 + $0x38] sm:$0xf]
    %v450 = vld [vmem:[%s434 + $0x3c] sm:$0xf]
    %v467 = vunpack.c.l.b16 %v435
    %v468 = vunpack.c.l.b16 %v436
    %v469 = vunpack.c.l.b16 %v437
    %v470 = vunpack.c.l.b16 %v438
    %v471 = vunpack.c.l.b16 %v439
    %v472 = vunpack.c.l.b16 %v440
    %v473 = vunpack.c.l.b16 %v441
    %v474 = vunpack.c.l.b16 %v442
    %v475 = vunpack.c.l.b16 %v443
    %v476 = vunpack.c.l.b16 %v444
    %v477 = vunpack.c.l.b16 %v445
    %v478 = vunpack.c.l.b16 %v446
    %v479 = vunpack.c.l.b16 %v447
    %v480 = vunpack.c.l.b16 %v448
    %v481 = vunpack.c.l.b16 %v449
    %v482 = vunpack.c.l.b16 %v450
    %v483 = vpack.c.b16 %v468, %v467
    %v484 = vpack.c.b16 %v470, %v469
    %v485 = vpack.c.b16 %v472, %v471
    %v486 = vpack.c.b16 %v474, %v473
    %v487 = vpack.c.b16 %v476, %v475
    %v488 = vpack.c.b16 %v478, %v477
    %v489 = vpack.c.b16 %v480, %v479
    %v490 = vpack.c.b16 %v482, %v481
    %499 = vmatpush.bf16.msra.mxu0 %v490
    %500 = vmatpush.bf16.msra.mxu0 %v489
    %501 = vmatpush.bf16.msra.mxu0 %v488
    %502 = vmatpush.bf16.msra.mxu0 %v487
    %503 = vmatpush.bf16.msra.mxu0 %v486
    %504 = vmatpush.bf16.msra.mxu0 %v485
    %505 = vmatpush.bf16.msra.mxu0 %v484
    %506 = vmatpush.bf16.msra.mxu0 %v483
    %507 = vmatmul.bf16.gmra.mxu0 %v433
    %v508 = vpop.f32.mrf.mxu0
    %v509 = vadd.f32 0.0, %v508
    %v510 = vpop.f32.mrf.mxu0
    %v511 = vadd.f32 0.0, %v510
    %512 = vdwg.mxu0
    %v513 = vmax.f32 %v509, 0.0
    %v514 = vmax.f32 %v511, 0.0
    %v515 = vpack.c.bf16 %v514, %v513
    %s516 = scalar_lea.vmem [#allocation7], 256
    %v517 = vld [vmem:[%s516] sm:$0xf]
    %v518 = vld [vmem:[%s516 + $0x4] sm:$0xf]
    %v519 = vld [vmem:[%s516 + $0x8] sm:$0xf]
    %v520 = vld [vmem:[%s516 + $0xc] sm:$0xf]
    %v521 = vld [vmem:[%s516 + $0x10] sm:$0xf]
    %v522 = vld [vmem:[%s516 + $0x14] sm:$0xf]
    %v523 = vld [vmem:[%s516 + $0x18] sm:$0xf]
    %v524 = vld [vmem:[%s516 + $0x1c] sm:$0xf]
    %v525 = vld [vmem:[%s516 + $0x20] sm:$0xf]
    %v526 = vld [vmem:[%s516 + $0x24] sm:$0xf]
    %v527 = vld [vmem:[%s516 + $0x28] sm:$0xf]
    %v528 = vld [vmem:[%s516 + $0x2c] sm:$0xf]
    %v529 = vld [vmem:[%s516 + $0x30] sm:$0xf]
    %v530 = vld [vmem:[%s516 + $0x34] sm:$0xf]
    %v531 = vld [vmem:[%s516 + $0x38] sm:$0xf]
    %v532 = vld [vmem:[%s516 + $0x3c] sm:$0xf]
    %v533 = vrot.slane %v513, 7
    %v534 = vrot.slane %v514, 7
    %v535 = vsel %vm196, %v533, %v534
    %v536 = vsel %vm196, %v534, %v533
    %v537 = vsel %vm91, %v536, 0.0
    %v538 = vsel %vm92, %v535, 0.0
    %v539 = vpack.c.bf16 %v538, %v537
    %v540 = vrot.slane %v513, 1
    %v541 = vrot.slane %v514, 1
    %v542 = vsel %vm204, %v540, %v541
    %v543 = vsel %vm204, %v541, %v540
    %v544 = vsel %vm93, %v542, 0.0
    %v545 = vsel %vm94, %v543, 0.0
    %v546 = vpack.c.bf16 %v545, %v544
    %s547 = scalar_lea.vmem [#allocation7], 192
    %v548 = vld [vmem:[%s547] sm:$0xf]
    %v549 = vld [vmem:[%s547 + $0x4] sm:$0xf]
    %v550 = vld [vmem:[%s547 + $0x8] sm:$0xf]
    %v551 = vld [vmem:[%s547 + $0xc] sm:$0xf]
    %v552 = vld [vmem:[%s547 + $0x10] sm:$0xf]
    %v553 = vld [vmem:[%s547 + $0x14] sm:$0xf]
    %v554 = vld [vmem:[%s547 + $0x18] sm:$0xf]
    %v555 = vld [vmem:[%s547 + $0x1c] sm:$0xf]
    %v556 = vld [vmem:[%s547 + $0x20] sm:$0xf]
    %v557 = vld [vmem:[%s547 + $0x24] sm:$0xf]
    %v558 = vld [vmem:[%s547 + $0x28] sm:$0xf]
    %v559 = vld [vmem:[%s547 + $0x2c] sm:$0xf]
    %v560 = vld [vmem:[%s547 + $0x30] sm:$0xf]
    %v561 = vld [vmem:[%s547 + $0x34] sm:$0xf]
    %v562 = vld [vmem:[%s547 + $0x38] sm:$0xf]
    %v563 = vld [vmem:[%s547 + $0x3c] sm:$0xf]
    %v580 = vunpack.c.l.b16 %v548
    %v581 = vunpack.c.l.b16 %v549
    %v582 = vunpack.c.l.b16 %v550
    %v583 = vunpack.c.l.b16 %v551
    %v584 = vunpack.c.l.b16 %v552
    %v585 = vunpack.c.l.b16 %v553
    %v586 = vunpack.c.l.b16 %v554
    %v587 = vunpack.c.l.b16 %v555
    %v588 = vunpack.c.l.b16 %v556
    %v589 = vunpack.c.l.b16 %v557
    %v590 = vunpack.c.l.b16 %v558
    %v591 = vunpack.c.l.b16 %v559
    %v592 = vunpack.c.l.b16 %v560
    %v593 = vunpack.c.l.b16 %v561
    %v594 = vunpack.c.l.b16 %v562
    %v595 = vunpack.c.l.b16 %v563
    %v596 = vpack.c.b16 %v581, %v580
    %v597 = vpack.c.b16 %v583, %v582
    %v598 = vpack.c.b16 %v585, %v584
    %v599 = vpack.c.b16 %v587, %v586
    %v600 = vpack.c.b16 %v589, %v588
    %v601 = vpack.c.b16 %v591, %v590
    %v602 = vpack.c.b16 %v593, %v592
    %v603 = vpack.c.b16 %v595, %v594
    %612 = vmatpush.bf16.msra.mxu0 %v603
    %613 = vmatpush.bf16.msra.mxu0 %v602
    %614 = vmatpush.bf16.msra.mxu0 %v601
    %615 = vmatpush.bf16.msra.mxu0 %v600
    %616 = vmatpush.bf16.msra.mxu0 %v599
    %617 = vmatpush.bf16.msra.mxu0 %v598
    %618 = vmatpush.bf16.msra.mxu0 %v597
    %619 = vmatpush.bf16.msra.mxu0 %v596
    %620 = vmatmul.bf16.gmra.mxu0 %v539
    %v621 = vpop.f32.mrf.mxu0
    %v622 = vadd.f32 0.0, %v621
    %v623 = vpop.f32.mrf.mxu0
    %v624 = vadd.f32 0.0, %v623
    %625 = vdwg.mxu0
    %v642 = vunpack.c.l.b16 %v517
    %v643 = vunpack.c.l.b16 %v518
    %v644 = vunpack.c.l.b16 %v519
    %v645 = vunpack.c.l.b16 %v520
    %v646 = vunpack.c.l.b16 %v521
    %v647 = vunpack.c.l.b16 %v522
    %v648 = vunpack.c.l.b16 %v523
    %v649 = vunpack.c.l.b16 %v524
    %v650 = vunpack.c.l.b16 %v525
    %v651 = vunpack.c.l.b16 %v526
    %v652 = vunpack.c.l.b16 %v527
    %v653 = vunpack.c.l.b16 %v528
    %v654 = vunpack.c.l.b16 %v529
    %v655 = vunpack.c.l.b16 %v530
    %v656 = vunpack.c.l.b16 %v531
    %v657 = vunpack.c.l.b16 %v532
    %v658 = vpack.c.b16 %v643, %v642
    %v659 = vpack.c.b16 %v645, %v644
    %v660 = vpack.c.b16 %v647, %v646
    %v661 = vpack.c.b16 %v649, %v648
    %v662 = vpack.c.b16 %v651, %v650
    %v663 = vpack.c.b16 %v653, %v652
    %v664 = vpack.c.b16 %v655, %v654
    %v665 = vpack.c.b16 %v657, %v656
    %674 = vmatpush.bf16.msra.mxu0 %v665
    %675 = vmatpush.bf16.msra.mxu0 %v664
    %676 = vmatpush.bf16.msra.mxu0 %v663
    %677 = vmatpush.bf16.msra.mxu0 %v662
    %678 = vmatpush.bf16.msra.mxu0 %v661
    %679 = vmatpush.bf16.msra.mxu0 %v660
    %680 = vmatpush.bf16.msra.mxu0 %v659
    %681 = vmatpush.bf16.msra.mxu0 %v658
    %682 = vmatmul.bf16.gmra.mxu0 %v515
    %v683 = vpop.f32.mrf.mxu0
    %v684 = vadd.f32 %v622, %v683
    %v685 = vpop.f32.mrf.mxu0
    %v686 = vadd.f32 %v624, %v685
    %687 = vdwg.mxu0
    %s688 = scalar_lea.vmem [#allocation7], 320
    %v689 = vld [vmem:[%s688] sm:$0xf]
    %v690 = vld [vmem:[%s688 + $0x4] sm:$0xf]
    %v691 = vld [vmem:[%s688 + $0x8] sm:$0xf]
    %v692 = vld [vmem:[%s688 + $0xc] sm:$0xf]
    %v693 = vld [vmem:[%s688 + $0x10] sm:$0xf]
    %v694 = vld [vmem:[%s688 + $0x14] sm:$0xf]
    %v695 = vld [vmem:[%s688 + $0x18] sm:$0xf]
    %v696 = vld [vmem:[%s688 + $0x1c] sm:$0xf]
    %v697 = vld [vmem:[%s688 + $0x20] sm:$0xf]
    %v698 = vld [vmem:[%s688 + $0x24] sm:$0xf]
    %v699 = vld [vmem:[%s688 + $0x28] sm:$0xf]
    %v700 = vld [vmem:[%s688 + $0x2c] sm:$0xf]
    %v701 = vld [vmem:[%s688 + $0x30] sm:$0xf]
    %v702 = vld [vmem:[%s688 + $0x34] sm:$0xf]
    %v703 = vld [vmem:[%s688 + $0x38] sm:$0xf]
    %v704 = vld [vmem:[%s688 + $0x3c] sm:$0xf]
    %v721 = vunpack.c.l.b16 %v689
    %v722 = vunpack.c.l.b16 %v690
    %v723 = vunpack.c.l.b16 %v691
    %v724 = vunpack.c.l.b16 %v692
    %v725 = vunpack.c.l.b16 %v693
    %v726 = vunpack.c.l.b16 %v694
    %v727 = vunpack.c.l.b16 %v695
    %v728 = vunpack.c.l.b16 %v696
    %v729 = vunpack.c.l.b16 %v697
    %v730 = vunpack.c.l.b16 %v698
    %v731 = vunpack.c.l.b16 %v699
    %v732 = vunpack.c.l.b16 %v700
    %v733 = vunpack.c.l.b16 %v701
    %v734 = vunpack.c.l.b16 %v702
    %v735 = vunpack.c.l.b16 %v703
    %v736 = vunpack.c.l.b16 %v704
    %v737 = vpack.c.b16 %v722, %v721
    %v738 = vpack.c.b16 %v724, %v723
    %v739 = vpack.c.b16 %v726, %v725
    %v740 = vpack.c.b16 %v728, %v727
    %v741 = vpack.c.b16 %v730, %v729
    %v742 = vpack.c.b16 %v732, %v731
    %v743 = vpack.c.b16 %v734, %v733
    %v744 = vpack.c.b16 %v736, %v735
    %753 = vmatpush.bf16.msra.mxu0 %v744
    %754 = vmatpush.bf16.msra.mxu0 %v743
    %755 = vmatpush.bf16.msra.mxu0 %v742
    %756 = vmatpush.bf16.msra.mxu0 %v741
    %757 = vmatpush.bf16.msra.mxu0 %v740
    %758 = vmatpush.bf16.msra.mxu0 %v739
    %759 = vmatpush.bf16.msra.mxu0 %v738
    %760 = vmatpush.bf16.msra.mxu0 %v737
    %761 = vmatmul.bf16.gmra.mxu0 %v546
    %v762 = vpop.f32.mrf.mxu0
    %v763 = vadd.f32 0.0, %v762
    %v764 = vpop.f32.mrf.mxu0
    %v765 = vadd.f32 0.0, %v764
    %766 = vdwg.mxu0
    %v767 = vadd.f32 %v684, %v763
    %v768 = vadd.f32 %v686, %v765
    %v769 = vmax.f32 %v767, 0.0
    %v770 = vmax.f32 %v768, 0.0
    %v771 = vpack.c.bf16 %v770, %v769
    %s772 = scalar_lea.vmem [#allocation5], 128
    %v773 = vld [vmem:[%s772] sm:$0xf]
    %v774 = vld [vmem:[%s772 + $0x4] sm:$0xf]
    %v775 = vld [vmem:[%s772 + $0x8] sm:$0xf]
    %v776 = vld [vmem:[%s772 + $0xc] sm:$0xf]
    %v777 = vld [vmem:[%s772 + $0x10] sm:$0xf]
    %v778 = vld [vmem:[%s772 + $0x14] sm:$0xf]
    %v779 = vld [vmem:[%s772 + $0x18] sm:$0xf]
    %v780 = vld [vmem:[%s772 + $0x1c] sm:$0xf]
    %v781 = vld [vmem:[%s772 + $0x20] sm:$0xf]
    %v782 = vld [vmem:[%s772 + $0x24] sm:$0xf]
    %v783 = vld [vmem:[%s772 + $0x28] sm:$0xf]
    %v784 = vld [vmem:[%s772 + $0x2c] sm:$0xf]
    %v785 = vld [vmem:[%s772 + $0x30] sm:$0xf]
    %v786 = vld [vmem:[%s772 + $0x34] sm:$0xf]
    %v787 = vld [vmem:[%s772 + $0x38] sm:$0xf]
    %v788 = vld [vmem:[%s772 + $0x3c] sm:$0xf]
    %v805 = vunpack.c.l.b16 %v773
    %v806 = vunpack.c.l.b16 %v774
    %v807 = vunpack.c.l.b16 %v775
    %v808 = vunpack.c.l.b16 %v776
    %v809 = vunpack.c.l.b16 %v777
    %v810 = vunpack.c.l.b16 %v778
    %v811 = vunpack.c.l.b16 %v779
    %v812 = vunpack.c.l.b16 %v780
    %v813 = vunpack.c.l.b16 %v781
    %v814 = vunpack.c.l.b16 %v782
    %v815 = vunpack.c.l.b16 %v783
    %v816 = vunpack.c.l.b16 %v784
    %v817 = vunpack.c.l.b16 %v785
    %v818 = vunpack.c.l.b16 %v786
    %v819 = vunpack.c.l.b16 %v787
    %v820 = vunpack.c.l.b16 %v788
    %v821 = vpack.c.b16 %v806, %v805
    %v822 = vpack.c.b16 %v808, %v807
    %v823 = vpack.c.b16 %v810, %v809
    %v824 = vpack.c.b16 %v812, %v811
    %v825 = vpack.c.b16 %v814, %v813
    %v826 = vpack.c.b16 %v816, %v815
    %v827 = vpack.c.b16 %v818, %v817
    %v828 = vpack.c.b16 %v820, %v819
    %837 = vmatpush.bf16.msra.mxu0 %v828
    %838 = vmatpush.bf16.msra.mxu0 %v827
    %839 = vmatpush.bf16.msra.mxu0 %v826
    %840 = vmatpush.bf16.msra.mxu0 %v825
    %841 = vmatpush.bf16.msra.mxu0 %v824
    %842 = vmatpush.bf16.msra.mxu0 %v823
    %843 = vmatpush.bf16.msra.mxu0 %v822
    %844 = vmatpush.bf16.msra.mxu0 %v821
    %845 = vmatmul.bf16.gmra.mxu0 %v771
    %v846 = vpop.f32.mrf.mxu0
    %v847 = vadd.f32 0.0, %v846
    %v848 = vpop.f32.mrf.mxu0
    %v849 = vadd.f32 0.0, %v848
    %850 = vdwg.mxu0
    %v851 = vmax.f32 %v847, 0.0
    %v852 = vmax.f32 %v849, 0.0
    %v853 = vpack.c.bf16 %v852, %v851
    %s854 = scalar_lea.vmem [#allocation7], 448
    %v855 = vld [vmem:[%s854] sm:$0xf]
    %v856 = vld [vmem:[%s854 + $0x4] sm:$0xf]
    %v857 = vld [vmem:[%s854 + $0x8] sm:$0xf]
    %v858 = vld [vmem:[%s854 + $0xc] sm:$0xf]
    %v859 = vld [vmem:[%s854 + $0x10] sm:$0xf]
    %v860 = vld [vmem:[%s854 + $0x14] sm:$0xf]
    %v861 = vld [vmem:[%s854 + $0x18] sm:$0xf]
    %v862 = vld [vmem:[%s854 + $0x1c] sm:$0xf]
    %v863 = vld [vmem:[%s854 + $0x20] sm:$0xf]
    %v864 = vld [vmem:[%s854 + $0x24] sm:$0xf]
    %v865 = vld [vmem:[%s854 + $0x28] sm:$0xf]
    %v866 = vld [vmem:[%s854 + $0x2c] sm:$0xf]
    %v867 = vld [vmem:[%s854 + $0x30] sm:$0xf]
    %v868 = vld [vmem:[%s854 + $0x34] sm:$0xf]
    %v869 = vld [vmem:[%s854 + $0x38] sm:$0xf]
    %v870 = vld [vmem:[%s854 + $0x3c] sm:$0xf]
    %v871 = vrot.slane %v851, 7
    %v872 = vrot.slane %v852, 7
    %v873 = vsel %vm196, %v871, %v872
    %v874 = vsel %vm196, %v872, %v871
    %v875 = vsel %vm91, %v874, 0.0
    %v876 = vsel %vm92, %v873, 0.0
    %v877 = vpack.c.bf16 %v876, %v875
    %v878 = vrot.slane %v851, 1
    %v879 = vrot.slane %v852, 1
    %v880 = vsel %vm204, %v878, %v879
    %v881 = vsel %vm204, %v879, %v878
    %v882 = vsel %vm93, %v880, 0.0
    %v883 = vsel %vm94, %v881, 0.0
    %v884 = vpack.c.bf16 %v883, %v882
    %s885 = scalar_lea.vmem [#allocation7], 384
    %v886 = vld [vmem:[%s885] sm:$0xf]
    %v887 = vld [vmem:[%s885 + $0x4] sm:$0xf]
    %v888 = vld [vmem:[%s885 + $0x8] sm:$0xf]
    %v889 = vld [vmem:[%s885 + $0xc] sm:$0xf]
    %v890 = vld [vmem:[%s885 + $0x10] sm:$0xf]
    %v891 = vld [vmem:[%s885 + $0x14] sm:$0xf]
    %v892 = vld [vmem:[%s885 + $0x18] sm:$0xf]
    %v893 = vld [vmem:[%s885 + $0x1c] sm:$0xf]
    %v894 = vld [vmem:[%s885 + $0x20] sm:$0xf]
    %v895 = vld [vmem:[%s885 + $0x24] sm:$0xf]
    %v896 = vld [vmem:[%s885 + $0x28] sm:$0xf]
    %v897 = vld [vmem:[%s885 + $0x2c] sm:$0xf]
    %v898 = vld [vmem:[%s885 + $0x30] sm:$0xf]
    %v899 = vld [vmem:[%s885 + $0x34] sm:$0xf]
    %v900 = vld [vmem:[%s885 + $0x38] sm:$0xf]
    %v901 = vld [vmem:[%s885 + $0x3c] sm:$0xf]
    %v918 = vunpack.c.l.b16 %v886
    %v919 = vunpack.c.l.b16 %v887
    %v920 = vunpack.c.l.b16 %v888
    %v921 = vunpack.c.l.b16 %v889
    %v922 = vunpack.c.l.b16 %v890
    %v923 = vunpack.c.l.b16 %v891
    %v924 = vunpack.c.l.b16 %v892
    %v925 = vunpack.c.l.b16 %v893
    %v926 = vunpack.c.l.b16 %v894
    %v927 = vunpack.c.l.b16 %v895
    %v928 = vunpack.c.l.b16 %v896
    %v929 = vunpack.c.l.b16 %v897
    %v930 = vunpack.c.l.b16 %v898
    %v931 = vunpack.c.l.b16 %v899
    %v932 = vunpack.c.l.b16 %v900
    %v933 = vunpack.c.l.b16 %v901
    %v934 = vpack.c.b16 %v919, %v918
    %v935 = vpack.c.b16 %v921, %v920
    %v936 = vpack.c.b16 %v923, %v922
    %v937 = vpack.c.b16 %v925, %v924
    %v938 = vpack.c.b16 %v927, %v926
    %v939 = vpack.c.b16 %v929, %v928
    %v940 = vpack.c.b16 %v931, %v930
    %v941 = vpack.c.b16 %v933, %v932
    %950 = vmatpush.bf16.msra.mxu0 %v941
    %951 = vmatpush.bf16.msra.mxu0 %v940
    %952 = vmatpush.bf16.msra.mxu0 %v939
    %953 = vmatpush.bf16.msra.mxu0 %v938
    %954 = vmatpush.bf16.msra.mxu0 %v937
    %955 = vmatpush.bf16.msra.mxu0 %v936
    %956 = vmatpush.bf16.msra.mxu0 %v935
    %957 = vmatpush.bf16.msra.mxu0 %v934
    %958 = vmatmul.bf16.gmra.mxu0 %v877
    %v959 = vpop.f32.mrf.mxu0
    %v960 = vadd.f32 0.0, %v959
    %v961 = vpop.f32.mrf.mxu0
    %v962 = vadd.f32 0.0, %v961
    %963 = vdwg.mxu0
    %v980 = vunpack.c.l.b16 %v855
    %v981 = vunpack.c.l.b16 %v856
    %v982 = vunpack.c.l.b16 %v857
    %v983 = vunpack.c.l.b16 %v858
    %v984 = vunpack.c.l.b16 %v859
    %v985 = vunpack.c.l.b16 %v860
    %v986 = vunpack.c.l.b16 %v861
    %v987 = vunpack.c.l.b16 %v862
    %v988 = vunpack.c.l.b16 %v863
    %v989 = vunpack.c.l.b16 %v864
    %v990 = vunpack.c.l.b16 %v865
    %v991 = vunpack.c.l.b16 %v866
    %v992 = vunpack.c.l.b16 %v867
    %v993 = vunpack.c.l.b16 %v868
    %v994 = vunpack.c.l.b16 %v869
    %v995 = vunpack.c.l.b16 %v870
    %v996 = vpack.c.b16 %v981, %v980
    %v997 = vpack.c.b16 %v983, %v982
    %v998 = vpack.c.b16 %v985, %v984
    %v999 = vpack.c.b16 %v987, %v986
    %v1000 = vpack.c.b16 %v989, %v988
    %v1001 = vpack.c.b16 %v991, %v990
    %v1002 = vpack.c.b16 %v993, %v992
    %v1003 = vpack.c.b16 %v995, %v994
    %1012 = vmatpush.bf16.msra.mxu0 %v1003
    %1013 = vmatpush.bf16.msra.mxu0 %v1002
    %1014 = vmatpush.bf16.msra.mxu0 %v1001
    %1015 = vmatpush.bf16.msra.mxu0 %v1000
    %1016 = vmatpush.bf16.msra.mxu0 %v999
    %1017 = vmatpush.bf16.msra.mxu0 %v998
    %1018 = vmatpush.bf16.msra.mxu0 %v997
    %1019 = vmatpush.bf16.msra.mxu0 %v996
    %1020 = vmatmul.bf16.gmra.mxu0 %v853
    %v1021 = vpop.f32.mrf.mxu0
    %v1022 = vadd.f32 %v960, %v1021
    %v1023 = vpop.f32.mrf.mxu0
    %v1024 = vadd.f32 %v962, %v1023
    %1025 = vdwg.mxu0
    %s1026 = scalar_lea.vmem [#allocation7], 512
    %v1027 = vld [vmem:[%s1026] sm:$0xf]
    %v1028 = vld [vmem:[%s1026 + $0x4] sm:$0xf]
    %v1029 = vld [vmem:[%s1026 + $0x8] sm:$0xf]
    %v1030 = vld [vmem:[%s1026 + $0xc] sm:$0xf]
    %v1031 = vld [vmem:[%s1026 + $0x10] sm:$0xf]
    %v1032 = vld [vmem:[%s1026 + $0x14] sm:$0xf]
    %v1033 = vld [vmem:[%s1026 + $0x18] sm:$0xf]
    %v1034 = vld [vmem:[%s1026 + $0x1c] sm:$0xf]
    %v1035 = vld [vmem:[%s1026 + $0x20] sm:$0xf]
    %v1036 = vld [vmem:[%s1026 + $0x24] sm:$0xf]
    %v1037 = vld [vmem:[%s1026 + $0x28] sm:$0xf]
    %v1038 = vld [vmem:[%s1026 + $0x2c] sm:$0xf]
    %v1039 = vld [vmem:[%s1026 + $0x30] sm:$0xf]
    %v1040 = vld [vmem:[%s1026 + $0x34] sm:$0xf]
    %v1041 = vld [vmem:[%s1026 + $0x38] sm:$0xf]
    %v1042 = vld [vmem:[%s1026 + $0x3c] sm:$0xf]
    %v1059 = vunpack.c.l.b16 %v1027
    %v1060 = vunpack.c.l.b16 %v1028
    %v1061 = vunpack.c.l.b16 %v1029
    %v1062 = vunpack.c.l.b16 %v1030
    %v1063 = vunpack.c.l.b16 %v1031
    %v1064 = vunpack.c.l.b16 %v1032
    %v1065 = vunpack.c.l.b16 %v1033
    %v1066 = vunpack.c.l.b16 %v1034
    %v1067 = vunpack.c.l.b16 %v1035
    %v1068 = vunpack.c.l.b16 %v1036
    %v1069 = vunpack.c.l.b16 %v1037
    %v1070 = vunpack.c.l.b16 %v1038
    %v1071 = vunpack.c.l.b16 %v1039
    %v1072 = vunpack.c.l.b16 %v1040
    %v1073 = vunpack.c.l.b16 %v1041
    %v1074 = vunpack.c.l.b16 %v1042
    %v1075 = vpack.c.b16 %v1060, %v1059
    %v1076 = vpack.c.b16 %v1062, %v1061
    %v1077 = vpack.c.b16 %v1064, %v1063
    %v1078 = vpack.c.b16 %v1066, %v1065
    %v1079 = vpack.c.b16 %v1068, %v1067
    %v1080 = vpack.c.b16 %v1070, %v1069
    %v1081 = vpack.c.b16 %v1072, %v1071
    %v1082 = vpack.c.b16 %v1074, %v1073
    %1091 = vmatpush.bf16.msra.mxu0 %v1082
    %1092 = vmatpush.bf16.msra.mxu0 %v1081
    %1093 = vmatpush.bf16.msra.mxu0 %v1080
    %1094 = vmatpush.bf16.msra.mxu0 %v1079
    %1095 = vmatpush.bf16.msra.mxu0 %v1078
    %1096 = vmatpush.bf16.msra.mxu0 %v1077
    %1097 = vmatpush.bf16.msra.mxu0 %v1076
    %1098 = vmatpush.bf16.msra.mxu0 %v1075
    %1099 = vmatmul.bf16.gmra.mxu0 %v884
    %v1100 = vpop.f32.mrf.mxu0
    %v1101 = vadd.f32 0.0, %v1100
    %v1102 = vpop.f32.mrf.mxu0
    %v1103 = vadd.f32 0.0, %v1102
    %1104 = vdwg.mxu0
    %v1105 = vadd.f32 %v1022, %v1101
    %v1106 = vadd.f32 %v1024, %v1103
    %v1107 = vadd.f32 %v1105, %v62
    %v1108 = vadd.f32 %v1106, %v63
    %1109 = vst [vmem:[#allocation8] sm:$0xff] %v1107
    %1110 = vst [vmem:[#allocation8 + $0x8] sm:$0xff] %v1108
    // Predicated region
    $region26: #{tpu_custom_call.1} parent=1 // pred_check
      _
    $region27: #{tpu_custom_call.1} parent=1 // pred_check_branch
      %1112 = sbr.rel (0) target = $region29
    $region28: #{tpu_custom_call.1} parent=1 // pred_region
      %1114 = vsyncadd [#allocation4], 0
      %s1115 = sshll.u32 [#allocation8], 4
      %s1116 = int_to_ptr.vmem [resolvable:$true] %s1115
      %s1117 = sshll.u32 %s3, 4
      %s1118 = int_to_ptr.hbm [resolvable:$true] %s1117
      %1123 = dma.vmem_to_hbm [thread:$0]  %s1116, 256, %s1118, [#allocation4], 128, 128, 8
    $region29: #{tpu_custom_call.1} parent=1 // pred_fallthru
      _
    // Predicated region
    $region30: #{tpu_custom_call.1} parent=1 // pred_check
      _
    $region31: #{tpu_custom_call.1} parent=1 // pred_check_branch
      %1125 = sbr.rel (0) target = $region33
    $region32: #{tpu_custom_call.1} parent=1 // pred_region
      %1127 = dma.done [#allocation4], 256
    $region33: #{tpu_custom_call.1} parent=1 // pred_fallthru
      _
    %1128 = vsyncpa [#allocation3], 1
    %1129 = vsyncpa [#allocation6], 1
    %1130 = vsyncpa [#allocation4], 1

</llo_original>
